<compile_context>
chip_gen: v7x
topology: tpu7x:2x2x1
jax: 0.10.0
libtpu: 0.0.40
codegen_flags: <defaults>
</compile_context>

<pallas_src>
import functools

import jax
import jax.numpy as jnp
from jax.experimental import pallas as pl
from jax.experimental.pallas import tpu as pltpu  # noqa: F401  (TPU backend)

LANE = 128


# --------------------------------------------------------------------------- #
# Kernel: two matmuls, bias+ReLU in f32, f32 accumulation.
# --------------------------------------------------------------------------- #
def _pllay_kernel(x_ref, wbd_ref, bcat_ref, wfc_ref, bfc_ref, o_ref, *, mxu_dtype):
    """Fused forward, single invocation (no grid).

    x_ref   : (B, C*D)   flattened NCHW pixels (f32 in HBM; cast once here)
    wbd_ref : (C*D, Fp)  block-diagonal stage-1 weight (pre-cast to mxu_dtype)
    bcat_ref: (1, Fp)    concatenated stage-1 bias (f32, zero in padded lanes)
    wfc_ref : (Fp, Np)   fc weight, rows beyond C*F zero (pre-cast to mxu_dtype)
    bfc_ref : (1, Np)    fc bias (f32, padded)
    o_ref   : (B, Np)    padded logits (f32)
    """
    x = x_ref[...]
    if mxu_dtype is not None:
        x = x.astype(mxu_dtype)                       # one whole-block cast
    # Stage 1: all channels in a single MXU push (block-diagonal weight).
    h = jnp.dot(x, wbd_ref[...], preferred_element_type=jnp.float32)   # (B, Fp)
    h = jnp.maximum(h + bcat_ref[...], 0.0)           # bias + ReLU in f32 (v5e-safe)
    if mxu_dtype is not None:
        h = h.astype(mxu_dtype)                       # MXU operand only
    # Stage 2: fc over the concatenated (padded) features.
    logits = jnp.dot(h, wfc_ref[...], preferred_element_type=jnp.float32)
    o_ref[...] = (logits + bfc_ref[...]).astype(o_ref.dtype)


# --------------------------------------------------------------------------- #
# One-time parameter preparation (hoisted out of the per-call path).
# --------------------------------------------------------------------------- #
def prepare_params(wt, bt, wfc, bfc, *, mxu_dtype=jnp.bfloat16):
    """wt: (C, D, F), bt: (C, F), wfc: (C, F, N), bfc: (N,)."""
    C, D, F = wt.shape
    N = wfc.shape[-1]
    CF = C * F
    Fp = max(LANE, pl.cdiv(CF, LANE) * LANE)          # stage-1 out lanes
    Np = max(LANE, pl.cdiv(N, LANE) * LANE)           # logits lanes

    # Block-diagonal stage-1 weight: W_bd[c*D:(c+1)*D, c*F:(c+1)*F] = wt[c].
    w_bd = jnp.zeros((C * D, Fp), jnp.float32)
    for c in range(C):
        w_bd = w_bd.at[c * D:(c + 1) * D, c * F:(c + 1) * F].set(wt[c])

    b_cat = jnp.zeros((1, Fp), jnp.float32).at[0, :CF].set(bt.reshape(CF))

    # fc weight reshaped to (C*F, N) and padded to (Fp, Np); padded rows are
    # irrelevant (h is zero there) but kept zero for safety.
    wfc_full = jnp.zeros((Fp, Np), jnp.float32).at[:CF, :N].set(wfc.reshape(CF, N))
    bfc_p = jnp.zeros((1, Np), jnp.float32).at[0, :N].set(bfc)

    if mxu_dtype is not None:
        w_bd = w_bd.astype(mxu_dtype)
        wfc_full = wfc_full.astype(mxu_dtype)

    params = {
        "w_bd": jax.block_until_ready(w_bd),
        "b_cat": jax.block_until_ready(b_cat),
        "wfc": jax.block_until_ready(wfc_full),
        "bfc": jax.block_until_ready(bfc_p),
        "mxu_dtype": mxu_dtype,
        "num_classes": N,
        "in_channels": C,
        "pixels_per_channel": D,
    }
    return params


# --------------------------------------------------------------------------- #
# Forward wrapper: reshape (free) -> pallas_call -> lane-pad slice.
# --------------------------------------------------------------------------- #
def scaled_pllay_forward(x_nchw, params):
    """x_nchw: (B, C, H, W) f32.  Returns logits (B, NUM_CLASSES) f32."""
    B, C, H, W = x_nchw.shape
    D = H * W
    assert C == params["in_channels"] and D == params["pixels_per_channel"]

    # Free row-major reshape: channel c occupies columns [c*D, (c+1)*D),
    # identical to torch flatten(input[:, [c], :, :]).  No transpose, no copy.
    x2d = x_nchw.reshape(B, C * D)

    w_bd, b_cat = params["w_bd"], params["b_cat"]
    wfc, bfc = params["wfc"], params["bfc"]
    N = params["num_classes"]
    Fp = w_bd.shape[-1]
    Np = wfc.shape[-1]

    flops = 2 * B * (C * D * Fp + Fp * Np)
    bytes_accessed = (
        x2d.size * x2d.dtype.itemsize
        + w_bd.size * w_bd.dtype.itemsize
        + b_cat.size * b_cat.dtype.itemsize
        + wfc.size * wfc.dtype.itemsize
        + bfc.size * bfc.dtype.itemsize
        + B * Np * 4
    )

    kernel = functools.partial(_pllay_kernel, mxu_dtype=params["mxu_dtype"])

    # Gridless: all operands live whole in VMEM; one invocation, no BlockSpecs.
    out_p = pl.pallas_call(
        kernel,
        out_shape=jax.ShapeDtypeStruct((B, Np), jnp.float32),
        cost_estimate=pl.CostEstimate(
            flops=flops, transcendentals=0, bytes_accessed=bytes_accessed),
    )(x2d, w_bd, b_cat, wfc, bfc)

    return out_p[:, :N]


# --------------------------------------------------------------------------- #
# Pure-JAX reference of the same semantics (correctness check).
# --------------------------------------------------------------------------- #
def reference_forward(x_nchw, wt, bt, wfc, bfc):
    B, C, H, W = x_nchw.shape
    D = H * W
    hs = []
    for c in range(C):
        xc = x_nchw[:, c, :, :].reshape(B, D)           # flatten(input[:, [c], :, :])
        hs.append(xc @ wt[c] + bt[c])                   # topo_layer_1{c+1} (linear surrogate)
    h = jnp.maximum(jnp.concatenate(hs, axis=-1), 0.0)  # concat + ReLU
    w_full = wfc.reshape(C * wfc.shape[1], wfc.shape[2])
    return h @ w_full + bfc                             # fc


if __name__ == "__main__":
    # Small shapes consistent with the module: in_channels=3, 16x16 images.
    B, C, H, W = 2, 3, 16, 16
    D = H * W
    OUT_FEATURES = 32
    NUM_CLASSES = 10

    key = jax.random.PRNGKey(0)
    k_x, k_wt, k_bt, k_wfc, k_bfc = jax.random.split(key, 5)

    x = jax.random.normal(k_x, (B, C, H, W), dtype=jnp.float32)

    # Deterministic synthetic parameters (no checkpoint load).
    wt = jax.random.normal(k_wt, (C, D, OUT_FEATURES), dtype=jnp.float32) * 0.05
    bt = jax.random.normal(k_bt, (C, OUT_FEATURES), dtype=jnp.float32) * 0.05
    wfc = jax.random.normal(k_wfc, (C, OUT_FEATURES, NUM_CLASSES), dtype=jnp.float32) * 0.05
    bfc = jax.random.normal(k_bfc, (NUM_CLASSES,), dtype=jnp.float32) * 0.05

    ref = reference_forward(x, wt, bt, wfc, bfc)

    # ---- f32 MXU-operand path (exact-semantics check) ----------------------
    params_f32 = prepare_params(wt, bt, wfc, bfc, mxu_dtype=None)
    out = jax.block_until_ready(scaled_pllay_forward(x, params_f32))
    assert out.shape == (B, NUM_CLASSES)
    assert jnp.allclose(out, ref, atol=1e-4, rtol=1e-4), "f32 kernel mismatch vs reference"

    # ---- bf16 MXU-operand path (default; f32 accumulation) -----------------
    params_bf16 = prepare_params(wt, bt, wfc, bfc, mxu_dtype=jnp.bfloat16)
    fwd = jax.jit(functools.partial(scaled_pllay_forward, params=params_bf16))
    out_bf16 = jax.block_until_ready(fwd(x))
    assert out_bf16.shape == (B, NUM_CLASSES)
    assert jnp.allclose(out_bf16, ref, atol=5e-2, rtol=5e-2), "bf16 kernel mismatch vs reference"

    print("KERNEL_OK")
</pallas_src>

<mosaic_0001>
module attributes {stable_mosaic.version = 11 : i64} {
  func.func @_pllay_kernel(%arg0: memref<2x768xf32, #tpu.memory_space<vmem>>, %arg1: memref<768x128xf32, #tpu.memory_space<vmem>>, %arg2: memref<1x128xf32, #tpu.memory_space<vmem>>, %arg3: memref<128x128xf32, #tpu.memory_space<vmem>>, %arg4: memref<1x128xf32, #tpu.memory_space<vmem>>, %arg5: memref<2x128xf32, #tpu.memory_space<vmem>>) attributes {dimension_semantics = [], scalar_prefetch = 0 : i64, scratch_operands = 0 : i64, tpu.core_type = #tpu.core_type<tc>} {
    %c0 = arith.constant 0 : index
    %c0_0 = arith.constant 0 : index
    %0 = vector.load %arg0[%c0, %c0_0] : memref<2x768xf32, #tpu.memory_space<vmem>>, vector<2x768xf32>
    %c0_1 = arith.constant 0 : index
    %c0_2 = arith.constant 0 : index
    %1 = vector.load %arg1[%c0_1, %c0_2] : memref<768x128xf32, #tpu.memory_space<vmem>>, vector<768x128xf32>
    %cst = arith.constant dense<0.000000e+00> : vector<2x128xf32>
    %2 = tpu.matmul %0, %1, %cst {dimension_numbers = #tpu.dot_dimension_numbers<[1], [0], [0], [1], [0, 0, 1, 1], [], []>} : vector<2x768xf32>, vector<768x128xf32>, vector<2x128xf32> -> vector<2x128xf32>
    %c0_3 = arith.constant 0 : index
    %c0_4 = arith.constant 0 : index
    %3 = vector.load %arg2[%c0_3, %c0_4] : memref<1x128xf32, #tpu.memory_space<vmem>>, vector<1x128xf32>
    %4 = vector.broadcast %3 : vector<1x128xf32> to vector<2x128xf32>
    %5 = arith.addf %2, %4 : vector<2x128xf32>
    %cst_5 = arith.constant 0.000000e+00 : f32
    %6 = vector.broadcast %cst_5 : f32 to vector<2x128xf32>
    %7 = arith.maximumf %5, %6 : vector<2x128xf32>
    %c0_6 = arith.constant 0 : index
    %c0_7 = arith.constant 0 : index
    %8 = vector.load %arg3[%c0_6, %c0_7] : memref<128x128xf32, #tpu.memory_space<vmem>>, vector<128x128xf32>
    %cst_8 = arith.constant dense<0.000000e+00> : vector<2x128xf32>
    %9 = tpu.matmul %7, %8, %cst_8 {dimension_numbers = #tpu.dot_dimension_numbers<[1], [0], [0], [1], [0, 0, 1, 1], [], []>} : vector<2x128xf32>, vector<128x128xf32>, vector<2x128xf32> -> vector<2x128xf32>
    %c0_9 = arith.constant 0 : index
    %c0_10 = arith.constant 0 : index
    %10 = vector.load %arg4[%c0_9, %c0_10] : memref<1x128xf32, #tpu.memory_space<vmem>>, vector<1x128xf32>
    %11 = vector.broadcast %10 : vector<1x128xf32> to vector<2x128xf32>
    %12 = arith.addf %9, %11 : vector<2x128xf32>
    %c0_11 = arith.constant 0 : index
    %c0_12 = arith.constant 0 : index
    %13 = vector.load %arg5[%c0_11, %c0_12] : memref<2x128xf32, #tpu.memory_space<vmem>>, vector<2x128xf32>
    tpu.vector_store %arg5[%c0_11, %c0_12], %12 {strides = array<i32>} : memref<2x128xf32, #tpu.memory_space<vmem>>, vector<2x128xf32>,
    return
  }
}

</mosaic_0001>

<llo_original>
// kernel: tpu_custom_call.1
$region0: #{tpu_custom_call.1}
  #allocation0 [shape = 'u32[]', space=smem, size = 0x4, offset = 0x4, fixed_abs, tag = 'smem constant byte address 0x4 - core index']
  #allocation1 [shape = 'u32[144,128]{1,0:T(1,128)}', space=vmem, size = 0x12000, scoped, tag = 'internal scratch']
  %s0 = inlined_call_operand.hbm [shape: f32[2,768], index: 0, kind: input, shape index: {}]
  %s1 = inlined_call_operand.hbm [shape: f32[768,128], index: 1, kind: input, shape index: {}]
  %s2 = inlined_call_operand.vmem [shape: f32[1,128], index: 2, kind: input, shape index: {}]
  %s3 = inlined_call_operand.hbm [shape: f32[128,128], index: 3, kind: input, shape index: {}]
  %s4 = inlined_call_operand.vmem [shape: f32[1,128], index: 4, kind: input, shape index: {}]
  %s5 = inlined_call_operand.hbm [shape: f32[2,128], index: 5, kind: output, shape index: {}]
  %s6 = sld [smem:[#allocation0]]
  $region42: #{tpu_custom_call.1} parent=0
    _
  %s8 = ssub.s32 1, %s6
  %s9 = scalar_select 0, %s8, %s6
  $region1: #{tpu_custom_call.1} parent=0
    #allocation2 [shape = 'u8[6144]{0}', space=vmem, size = 0x1800, scoped, tag = 'input window, operand 0, single buffered']
    #allocation3 [shape = 's32[1]{0}', space=sflag, size = 0x4, scoped, tag = 'scoped memory for tpu_custom_call.1']
    #allocation4 [shape = 's32[1]{0}', space=sflag, size = 0x4, scoped, tag = 'scoped memory for tpu_custom_call.1']
    #allocation5 [shape = 'u8[393216]{0}', space=vmem, size = 0x60000, scoped, tag = 'input window, operand 1, single buffered']
    #allocation6 [shape = 's32[1]{0}', space=sflag, size = 0x4, scoped, tag = 'scoped memory for tpu_custom_call.1']
    #allocation7 [shape = 'u8[65536]{0}', space=vmem, size = 0x10000, scoped, tag = 'input window, operand 3, single buffered']
    #allocation8 [shape = 'u8[1024]{0}', space=vmem, size = 0x400, scoped, tag = 'output window, operand 0, single buffered']
    %10 = vsyncpa [#allocation3], 0
    %11 = vsyncpa [#allocation6], 0
    %12 = vsyncpa [#allocation4], 0
    // Predicated region
    $region2: #{tpu_custom_call.1} parent=1 // pred_check
      _
    $region3: #{tpu_custom_call.1} parent=1 // pred_check_branch
      %14 = sbr.rel (0) target = $region5
    $region4: #{tpu_custom_call.1} parent=1 // pred_region
      %s16 = ssub.s32 192, 192
      %17 = vsyncadd [#allocation3], %s16
      %s19 = sshll.u32 [#allocation2], 4
      %s20 = int_to_ptr.vmem [resolvable:$true] %s19
      %22 = dma.hbm_to_vmem [thread:$0]  %s0, 192, %s20, [#allocation3]
    $region5: #{tpu_custom_call.1} parent=1 // pred_fallthru
      _
    // Predicated region
    $region6: #{tpu_custom_call.1} parent=1 // pred_check
      _
    $region7: #{tpu_custom_call.1} parent=1 // pred_check_branch
      %24 = sbr.rel (0) target = $region9
    $region8: #{tpu_custom_call.1} parent=1 // pred_region
      %s26 = ssub.s32 12288, 12288
      %27 = vsyncadd [#allocation6], %s26
      %s28 = sshll.u32 [#allocation5], 4
      %s29 = int_to_ptr.vmem [resolvable:$true] %s28
      %34 = dma.hbm_to_vmem [thread:$0]  %s1, 12288, %s29, [#allocation6], 128, 128, 8
    $region9: #{tpu_custom_call.1} parent=1 // pred_fallthru
      _
    // Predicated region
    $region10: #{tpu_custom_call.1} parent=1 // pred_check
      _
    $region11: #{tpu_custom_call.1} parent=1 // pred_check_branch
      %36 = sbr.rel (0) target = $region13
    $region12: #{tpu_custom_call.1} parent=1 // pred_region
      _
    $region13: #{tpu_custom_call.1} parent=1 // pred_fallthru
      _
    // Predicated region
    $region14: #{tpu_custom_call.1} parent=1 // pred_check
      _
    $region15: #{tpu_custom_call.1} parent=1 // pred_check_branch
      %38 = sbr.rel (0) target = $region17
    $region16: #{tpu_custom_call.1} parent=1 // pred_region
      %s40 = ssub.s32 2048, 2048
      %41 = vsyncadd [#allocation6], %s40
      %s42 = sshll.u32 [#allocation7], 4
      %s43 = int_to_ptr.vmem [resolvable:$true] %s42
      %48 = dma.hbm_to_vmem [thread:$0]  %s3, 2048, %s43, [#allocation6], 128, 128, 8
    $region17: #{tpu_custom_call.1} parent=1 // pred_fallthru
      _
    // Predicated region
    $region18: #{tpu_custom_call.1} parent=1 // pred_check
      _
    $region19: #{tpu_custom_call.1} parent=1 // pred_check_branch
      %50 = sbr.rel (0) target = $region21
    $region20: #{tpu_custom_call.1} parent=1 // pred_region
      _
    $region21: #{tpu_custom_call.1} parent=1 // pred_fallthru
      _
    // Predicated region
    $region22: #{tpu_custom_call.1} parent=1 // pred_check
      _
    $region23: #{tpu_custom_call.1} parent=1 // pred_check_branch
      %52 = sbr.rel (0) target = $region25
    $region24: #{tpu_custom_call.1} parent=1 // pred_region
      %53 = dma.done [#allocation3], 192
    $region25: #{tpu_custom_call.1} parent=1 // pred_fallthru
      _
    // Predicated region
    $region26: #{tpu_custom_call.1} parent=1 // pred_check
      _
    $region27: #{tpu_custom_call.1} parent=1 // pred_check_branch
      %55 = sbr.rel (0) target = $region29
    $region28: #{tpu_custom_call.1} parent=1 // pred_region
      %56 = dma.done [#allocation6], 12288
    $region29: #{tpu_custom_call.1} parent=1 // pred_fallthru
      _
    // Predicated region
    $region30: #{tpu_custom_call.1} parent=1 // pred_check
      _
    $region31: #{tpu_custom_call.1} parent=1 // pred_check_branch
      %58 = sbr.rel (0) target = $region33
    $region32: #{tpu_custom_call.1} parent=1 // pred_region
      %59 = dma.done [#allocation6], 2048
    $region33: #{tpu_custom_call.1} parent=1 // pred_fallthru
      _
    %v60 = vld [vmem:[#allocation2] sm:$0xff]
    %v61 = vld [vmem:[#allocation2 + $0x8] sm:$0xf]
    %v62 = vld [vmem:[#allocation5] sm:$0xff]
    %v63 = vld [vmem:[#allocation5 + $0x8] sm:$0xff]
    %v64 = vld [vmem:[#allocation5 + $0x10] sm:$0xff]
    %v65 = vld [vmem:[#allocation5 + $0x18] sm:$0xff]
    %v66 = vld [vmem:[#allocation5 + $0x20] sm:$0xff]
    %v67 = vld [vmem:[#allocation5 + $0x28] sm:$0xff]
    %v68 = vld [vmem:[#allocation5 + $0x30] sm:$0xff]
    %v69 = vld [vmem:[#allocation5 + $0x38] sm:$0xff]
    %v70 = vld [vmem:[#allocation5 + $0x40] sm:$0xff]
    %v71 = vld [vmem:[#allocation5 + $0x48] sm:$0xff]
    %v72 = vld [vmem:[#allocation5 + $0x50] sm:$0xff]
    %v73 = vld [vmem:[#allocation5 + $0x58] sm:$0xff]
    %v74 = vld [vmem:[#allocation5 + $0x60] sm:$0xff]
    %v75 = vld [vmem:[#allocation5 + $0x68] sm:$0xff]
    %v76 = vld [vmem:[#allocation5 + $0x70] sm:$0xff]
    %v77 = vld [vmem:[#allocation5 + $0x78] sm:$0xff]
    %v78 = vld [vmem:[#allocation5 + $0x80] sm:$0xff]
    %v79 = vld [vmem:[#allocation5 + $0x88] sm:$0xff]
    %v80 = vld [vmem:[#allocation5 + $0x90] sm:$0xff]
    %v81 = vld [vmem:[#allocation5 + $0x98] sm:$0xff]
    %v82 = vld [vmem:[#allocation5 + $0xa0] sm:$0xff]
    %v83 = vld [vmem:[#allocation5 + $0xa8] sm:$0xff]
    %v84 = vld [vmem:[#allocation5 + $0xb0] sm:$0xff]
    %v85 = vld [vmem:[#allocation5 + $0xb8] sm:$0xff]
    %v86 = vld [vmem:[#allocation5 + $0xc0] sm:$0xff]
    %v87 = vld [vmem:[#allocation5 + $0xc8] sm:$0xff]
    %v88 = vld [vmem:[#allocation5 + $0xd0] sm:$0xff]
    %v89 = vld [vmem:[#allocation5 + $0xd8] sm:$0xff]
    %v90 = vld [vmem:[#allocation5 + $0xe0] sm:$0xff]
    %v91 = vld [vmem:[#allocation5 + $0xe8] sm:$0xff]
    %v92 = vld [vmem:[#allocation5 + $0xf0] sm:$0xff]
    %v93 = vld [vmem:[#allocation5 + $0xf8] sm:$0xff]
    %v94 = vld [vmem:[#allocation5 + $0x100] sm:$0xff]
    %v95 = vld [vmem:[#allocation5 + $0x108] sm:$0xff]
    %v96 = vld [vmem:[#allocation5 + $0x110] sm:$0xff]
    %v97 = vld [vmem:[#allocation5 + $0x118] sm:$0xff]
    %v98 = vld [vmem:[#allocation5 + $0x120] sm:$0xff]
    %v99 = vld [vmem:[#allocation5 + $0x128] sm:$0xff]
    %v100 = vld [vmem:[#allocation5 + $0x130] sm:$0xff]
    %v101 = vld [vmem:[#allocation5 + $0x138] sm:$0xff]
    %v102 = vld [vmem:[#allocation5 + $0x140] sm:$0xff]
    %v103 = vld [vmem:[#allocation5 + $0x148] sm:$0xff]
    %v104 = vld [vmem:[#allocation5 + $0x150] sm:$0xff]
    %v105 = vld [vmem:[#allocation5 + $0x158] sm:$0xff]
    %v106 = vld [vmem:[#allocation5 + $0x160] sm:$0xff]
    %v107 = vld [vmem:[#allocation5 + $0x168] sm:$0xff]
    %v108 = vld [vmem:[#allocation5 + $0x170] sm:$0xff]
    %v109 = vld [vmem:[#allocation5 + $0x178] sm:$0xff]
    %v110 = vld [vmem:[#allocation5 + $0x180] sm:$0xff]
    %v111 = vld [vmem:[#allocation5 + $0x188] sm:$0xff]
    %v112 = vld [vmem:[#allocation5 + $0x190] sm:$0xff]
    %v113 = vld [vmem:[#allocation5 + $0x198] sm:$0xff]
    %v114 = vld [vmem:[#allocation5 + $0x1a0] sm:$0xff]
    %v115 = vld [vmem:[#allocation5 + $0x1a8] sm:$0xff]
    %v116 = vld [vmem:[#allocation5 + $0x1b0] sm:$0xff]
    %v117 = vld [vmem:[#allocation5 + $0x1b8] sm:$0xff]
    %v118 = vld [vmem:[#allocation5 + $0x1c0] sm:$0xff]
    %v119 = vld [vmem:[#allocation5 + $0x1c8] sm:$0xff]
    %v120 = vld [vmem:[#allocation5 + $0x1d0] sm:$0xff]
    %v121 = vld [vmem:[#allocation5 + $0x1d8] sm:$0xff]
    %v122 = vld [vmem:[#allocation5 + $0x1e0] sm:$0xff]
    %v123 = vld [vmem:[#allocation5 + $0x1e8] sm:$0xff]
    %v124 = vld [vmem:[#allocation5 + $0x1f0] sm:$0xff]
    %v125 = vld [vmem:[#allocation5 + $0x1f8] sm:$0xff]
    %v126 = vld [vmem:[#allocation5 + $0x200] sm:$0xff]
    %v127 = vld [vmem:[#allocation5 + $0x208] sm:$0xff]
    %v128 = vld [vmem:[#allocation5 + $0x210] sm:$0xff]
    %v129 = vld [vmem:[#allocation5 + $0x218] sm:$0xff]
    %v130 = vld [vmem:[#allocation5 + $0x220] sm:$0xff]
    %v131 = vld [vmem:[#allocation5 + $0x228] sm:$0xff]
    %v132 = vld [vmem:[#allocation5 + $0x230] sm:$0xff]
    %v133 = vld [vmem:[#allocation5 + $0x238] sm:$0xff]
    %v134 = vld [vmem:[#allocation5 + $0x240] sm:$0xff]
    %v135 = vld [vmem:[#allocation5 + $0x248] sm:$0xff]
    %v136 = vld [vmem:[#allocation5 + $0x250] sm:$0xff]
    %v137 = vld [vmem:[#allocation5 + $0x258] sm:$0xff]
    %v138 = vld [vmem:[#allocation5 + $0x260] sm:$0xff]
    %v139 = vld [vmem:[#allocation5 + $0x268] sm:$0xff]
    %v140 = vld [vmem:[#allocation5 + $0x270] sm:$0xff]
    %v141 = vld [vmem:[#allocation5 + $0x278] sm:$0xff]
    %v142 = vld [vmem:[#allocation5 + $0x280] sm:$0xff]
    %v143 = vld [vmem:[#allocation5 + $0x288] sm:$0xff]
    %v144 = vld [vmem:[#allocation5 + $0x290] sm:$0xff]
    %v145 = vld [vmem:[#allocation5 + $0x298] sm:$0xff]
    %v146 = vld [vmem:[#allocation5 + $0x2a0] sm:$0xff]
    %v147 = vld [vmem:[#allocation5 + $0x2a8] sm:$0xff]
    %v148 = vld [vmem:[#allocation5 + $0x2b0] sm:$0xff]
    %v149 = vld [vmem:[#allocation5 + $0x2b8] sm:$0xff]
    %v150 = vld [vmem:[#allocation5 + $0x2c0] sm:$0xff]
    %v151 = vld [vmem:[#allocation5 + $0x2c8] sm:$0xff]
    %v152 = vld [vmem:[#allocation5 + $0x2d0] sm:$0xff]
    %v153 = vld [vmem:[#allocation5 + $0x2d8] sm:$0xff]
    %v154 = vld [vmem:[#allocation5 + $0x2e0] sm:$0xff]
    %v155 = vld [vmem:[#allocation5 + $0x2e8] sm:$0xff]
    %v156 = vld [vmem:[#allocation5 + $0x2f0] sm:$0xff]
    %v157 = vld [vmem:[#allocation5 + $0x2f8] sm:$0xff]
    %v158 = vld [vmem:[%s2] sm:$0x1]
    %v160 = vlaneseq
    %v161 = vshrl.u32 %v160, 7
    %v162 = vsub.s32 0, %v161
    %v163 = vrot.slane %v158, %v162
    %v167 = vcombine.high %v60, %v60
    %v169 = vunpack.c.l.s4 1983009808
    %v170 = vunpack.c.0.s8 %v169
    %v171 = vlaneseq
    %v172 = vshrl.u32 %v171, 7
    %v173 = vsub.s32 %v170, %v172
    %v174 = vrot.slane %v60, %v173
    %v176 = vunpack.c.l.s4 1983009808
    %v177 = vunpack.c.0.s8 %v176
    %v178 = vlaneseq
    %v179 = vshrl.u32 %v178, 7
    %v180 = vsub.s32 %v177, %v179
    %v181 = vrot.slane %v167, %v180
    %v182 = vcombine.high %v174, %v174
    %v183 = vcombine.high %v181, %v181
    %v185 = vunpack.c.l.s4 1983009808
    %v186 = vunpack.c.0.s8 %v185
    %v187 = vlaneseq
    %v188 = vshrl.u32 %v187, 7
    %v189 = vsub.s32 %v186, %v188
    %v190 = vrot.slane %v61, %v189
    %v191 = vcombine.high %v190, %v190
    %198 = vmatprep.subr.mxu0 0.0
    %199 = vmatpush1.msra.mxu0 %v62
    %200 = vmatprep.subr.mxu0 0.0
    %201 = vmatpush1.msra.mxu0 %v63
    %202 = vmatprep.subr.mxu0 0.0
    %203 = vmatpush1.msra.mxu0 %v64
    %204 = vmatprep.subr.mxu0 0.0
    %205 = vmatpush1.msra.mxu0 %v65
    %206 = vmatprep.subr.mxu0 0.0
    %207 = vmatpush1.msra.mxu0 %v66
    %208 = vmatprep.subr.mxu0 0.0
    %209 = vmatpush1.msra.mxu0 %v67
    %210 = vmatprep.subr.mxu0 0.0
    %211 = vmatpush1.msra.mxu0 %v68
    %212 = vmatprep.subr.mxu0 0.0
    %213 = vmatpush1.msra.mxu0 %v69
    %214 = vmatprep.subr.mxu0 0.0
    %215 = vmatpush1.msra.mxu0 %v70
    %216 = vmatprep.subr.mxu0 0.0
    %217 = vmatpush1.msra.mxu0 %v71
    %218 = vmatprep.subr.mxu0 0.0
    %219 = vmatpush1.msra.mxu0 %v72
    %220 = vmatprep.subr.mxu0 0.0
    %221 = vmatpush1.msra.mxu0 %v73
    %222 = vmatprep.subr.mxu0 0.0
    %223 = vmatpush1.msra.mxu0 %v74
    %224 = vmatprep.subr.mxu0 0.0
    %225 = vmatpush1.msra.mxu0 %v75
    %226 = vmatprep.subr.mxu0 0.0
    %227 = vmatpush1.msra.mxu0 %v76
    %228 = vmatprep.subr.mxu0 0.0
    %229 = vmatpush1.msra.mxu0 %v77
    %230 = vmatprep.subr.mxu0 0.0
    %231 = vmatpush1.msra.mxu0 %v78
    %232 = vmatprep.subr.mxu0 0.0
    %233 = vmatpush1.msra.mxu0 %v79
    %234 = vmatprep.subr.mxu0 0.0
    %235 = vmatpush1.msra.mxu0 %v80
    %236 = vmatprep.subr.mxu0 0.0
    %237 = vmatpush1.msra.mxu0 %v81
    %238 = vmatprep.subr.mxu0 0.0
    %239 = vmatpush1.msra.mxu0 %v82
    %240 = vmatprep.subr.mxu0 0.0
    %241 = vmatpush1.msra.mxu0 %v83
    %242 = vmatprep.subr.mxu0 0.0
    %243 = vmatpush1.msra.mxu0 %v84
    %244 = vmatprep.subr.mxu0 0.0
    %245 = vmatpush1.msra.mxu0 %v85
    %246 = vmatprep.subr.mxu0 0.0
    %247 = vmatpush1.msra.mxu0 %v86
    %248 = vmatprep.subr.mxu0 0.0
    %249 = vmatpush1.msra.mxu0 %v87
    %250 = vmatprep.subr.mxu0 0.0
    %251 = vmatpush1.msra.mxu0 %v88
    %252 = vmatprep.subr.mxu0 0.0
    %253 = vmatpush1.msra.mxu0 %v89
    %254 = vmatprep.subr.mxu0 0.0
    %255 = vmatpush1.msra.mxu0 %v90
    %256 = vmatprep.subr.mxu0 0.0
    %257 = vmatpush1.msra.mxu0 %v91
    %258 = vmatprep.subr.mxu0 0.0
    %259 = vmatpush1.msra.mxu0 %v92
    %260 = vmatprep.subr.mxu0 0.0
    %261 = vmatpush1.msra.mxu0 %v93
    %262 = vmatprep.mubr.f32.mxu0 %v182
    %263 = vmatmul.mubr.f32.gmra.mrb[0].mxu0 %v174
    %v264 = vpop.f32.mrb[0].mxu0
    %v265 = vadd.f32 %v163, %v264
    %v266 = vpop.f32.mrb[0].mxu0
    %267 = vdwg.mxu0
    %268 = vmatprep.subr.mxu0 0.0
    %269 = vmatpush1.msra.mxu0 %v94
    %270 = vmatprep.subr.mxu0 0.0
    %271 = vmatpush1.msra.mxu0 %v95
    %272 = vmatprep.subr.mxu0 0.0
    %273 = vmatpush1.msra.mxu0 %v96
    %274 = vmatprep.subr.mxu0 0.0
    %275 = vmatpush1.msra.mxu0 %v97
    %276 = vmatprep.subr.mxu0 0.0
    %277 = vmatpush1.msra.mxu0 %v98
    %278 = vmatprep.subr.mxu0 0.0
    %279 = vmatpush1.msra.mxu0 %v99
    %280 = vmatprep.subr.mxu0 0.0
    %281 = vmatpush1.msra.mxu0 %v100
    %282 = vmatprep.subr.mxu0 0.0
    %283 = vmatpush1.msra.mxu0 %v101
    %284 = vmatprep.subr.mxu0 0.0
    %285 = vmatpush1.msra.mxu0 %v102
    %286 = vmatprep.subr.mxu0 0.0
    %287 = vmatpush1.msra.mxu0 %v103
    %288 = vmatprep.subr.mxu0 0.0
    %289 = vmatpush1.msra.mxu0 %v104
    %290 = vmatprep.subr.mxu0 0.0
    %291 = vmatpush1.msra.mxu0 %v105
    %292 = vmatprep.subr.mxu0 0.0
    %293 = vmatpush1.msra.mxu0 %v106
    %294 = vmatprep.subr.mxu0 0.0
    %295 = vmatpush1.msra.mxu0 %v107
    %296 = vmatprep.subr.mxu0 0.0
    %297 = vmatpush1.msra.mxu0 %v108
    %298 = vmatprep.subr.mxu0 0.0
    %299 = vmatpush1.msra.mxu0 %v109
    %300 = vmatprep.subr.mxu0 0.0
    %301 = vmatpush1.msra.mxu0 %v110
    %302 = vmatprep.subr.mxu0 0.0
    %303 = vmatpush1.msra.mxu0 %v111
    %304 = vmatprep.subr.mxu0 0.0
    %305 = vmatpush1.msra.mxu0 %v112
    %306 = vmatprep.subr.mxu0 0.0
    %307 = vmatpush1.msra.mxu0 %v113
    %308 = vmatprep.subr.mxu0 0.0
    %309 = vmatpush1.msra.mxu0 %v114
    %310 = vmatprep.subr.mxu0 0.0
    %311 = vmatpush1.msra.mxu0 %v115
    %312 = vmatprep.subr.mxu0 0.0
    %313 = vmatpush1.msra.mxu0 %v116
    %314 = vmatprep.subr.mxu0 0.0
    %315 = vmatpush1.msra.mxu0 %v117
    %316 = vmatprep.subr.mxu0 0.0
    %317 = vmatpush1.msra.mxu0 %v118
    %318 = vmatprep.subr.mxu0 0.0
    %319 = vmatpush1.msra.mxu0 %v119
    %320 = vmatprep.subr.mxu0 0.0
    %321 = vmatpush1.msra.mxu0 %v120
    %322 = vmatprep.subr.mxu0 0.0
    %323 = vmatpush1.msra.mxu0 %v121
    %324 = vmatprep.subr.mxu0 0.0
    %325 = vmatpush1.msra.mxu0 %v122
    %326 = vmatprep.subr.mxu0 0.0
    %327 = vmatpush1.msra.mxu0 %v123
    %328 = vmatprep.subr.mxu0 0.0
    %329 = vmatpush1.msra.mxu0 %v124
    %330 = vmatprep.subr.mxu0 0.0
    %331 = vmatpush1.msra.mxu0 %v125
    %332 = vmatprep.mubr.f32.mxu0 %v183
    %333 = vmatmul.mubr.f32.gmra.mrb[0].mxu0 %v181
    %v334 = vpop.f32.mrb[0].mxu0
    %v335 = vadd.f32 %v265, %v334
    %v336 = vpop.f32.mrb[0].mxu0
    %337 = vdwg.mxu0
    %338 = vmatprep.subr.mxu0 0.0
    %339 = vmatpush1.msra.mxu0 %v126
    %340 = vmatprep.subr.mxu0 0.0
    %341 = vmatpush1.msra.mxu0 %v127
    %342 = vmatprep.subr.mxu0 0.0
    %343 = vmatpush1.msra.mxu0 %v128
    %344 = vmatprep.subr.mxu0 0.0
    %345 = vmatpush1.msra.mxu0 %v129
    %346 = vmatprep.subr.mxu0 0.0
    %347 = vmatpush1.msra.mxu0 %v130
    %348 = vmatprep.subr.mxu0 0.0
    %349 = vmatpush1.msra.mxu0 %v131
    %350 = vmatprep.subr.mxu0 0.0
    %351 = vmatpush1.msra.mxu0 %v132
    %352 = vmatprep.subr.mxu0 0.0
    %353 = vmatpush1.msra.mxu0 %v133
    %354 = vmatprep.subr.mxu0 0.0
    %355 = vmatpush1.msra.mxu0 %v134
    %356 = vmatprep.subr.mxu0 0.0
    %357 = vmatpush1.msra.mxu0 %v135
    %358 = vmatprep.subr.mxu0 0.0
    %359 = vmatpush1.msra.mxu0 %v136
    %360 = vmatprep.subr.mxu0 0.0
    %361 = vmatpush1.msra.mxu0 %v137
    %362 = vmatprep.subr.mxu0 0.0
    %363 = vmatpush1.msra.mxu0 %v138
    %364 = vmatprep.subr.mxu0 0.0
    %365 = vmatpush1.msra.mxu0 %v139
    %366 = vmatprep.subr.mxu0 0.0
    %367 = vmatpush1.msra.mxu0 %v140
    %368 = vmatprep.subr.mxu0 0.0
    %369 = vmatpush1.msra.mxu0 %v141
    %370 = vmatprep.subr.mxu0 0.0
    %371 = vmatpush1.msra.mxu0 %v142
    %372 = vmatprep.subr.mxu0 0.0
    %373 = vmatpush1.msra.mxu0 %v143
    %374 = vmatprep.subr.mxu0 0.0
    %375 = vmatpush1.msra.mxu0 %v144
    %376 = vmatprep.subr.mxu0 0.0
    %377 = vmatpush1.msra.mxu0 %v145
    %378 = vmatprep.subr.mxu0 0.0
    %379 = vmatpush1.msra.mxu0 %v146
    %380 = vmatprep.subr.mxu0 0.0
    %381 = vmatpush1.msra.mxu0 %v147
    %382 = vmatprep.subr.mxu0 0.0
    %383 = vmatpush1.msra.mxu0 %v148
    %384 = vmatprep.subr.mxu0 0.0
    %385 = vmatpush1.msra.mxu0 %v149
    %386 = vmatprep.subr.mxu0 0.0
    %387 = vmatpush1.msra.mxu0 %v150
    %388 = vmatprep.subr.mxu0 0.0
    %389 = vmatpush1.msra.mxu0 %v151
    %390 = vmatprep.subr.mxu0 0.0
    %391 = vmatpush1.msra.mxu0 %v152
    %392 = vmatprep.subr.mxu0 0.0
    %393 = vmatpush1.msra.mxu0 %v153
    %394 = vmatprep.subr.mxu0 0.0
    %395 = vmatpush1.msra.mxu0 %v154
    %396 = vmatprep.subr.mxu0 0.0
    %397 = vmatpush1.msra.mxu0 %v155
    %398 = vmatprep.subr.mxu0 0.0
    %399 = vmatpush1.msra.mxu0 %v156
    %400 = vmatprep.subr.mxu0 0.0
    %401 = vmatpush1.msra.mxu0 %v157
    %402 = vmatprep.mubr.f32.mxu0 %v191
    %403 = vmatmul.mubr.f32.gmra.mrb[0].mxu0 %v190
    %v404 = vpop.f32.mrb[0].mxu0
    %v405 = vadd.f32 %v335, %v404
    %v406 = vpop.f32.mrb[0].mxu0
    %407 = vdwg.mxu0
    %v408 = vmax.f32 %v405, 0.0
    %v409 = vld [vmem:[#allocation7] sm:$0xff]
    %v410 = vld [vmem:[#allocation7 + $0x8] sm:$0xff]
    %v411 = vld [vmem:[#allocation7 + $0x10] sm:$0xff]
    %v412 = vld [vmem:[#allocation7 + $0x18] sm:$0xff]
    %v413 = vld [vmem:[#allocation7 + $0x20] sm:$0xff]
    %v414 = vld [vmem:[#allocation7 + $0x28] sm:$0xff]
    %v415 = vld [vmem:[#allocation7 + $0x30] sm:$0xff]
    %v416 = vld [vmem:[#allocation7 + $0x38] sm:$0xff]
    %v417 = vld [vmem:[#allocation7 + $0x40] sm:$0xff]
    %v418 = vld [vmem:[#allocation7 + $0x48] sm:$0xff]
    %v419 = vld [vmem:[#allocation7 + $0x50] sm:$0xff]
    %v420 = vld [vmem:[#allocation7 + $0x58] sm:$0xff]
    %v421 = vld [vmem:[#allocation7 + $0x60] sm:$0xff]
    %v422 = vld [vmem:[#allocation7 + $0x68] sm:$0xff]
    %v423 = vld [vmem:[#allocation7 + $0x70] sm:$0xff]
    %v424 = vld [vmem:[#allocation7 + $0x78] sm:$0xff]
    %v425 = vld [vmem:[%s4] sm:$0x1]
    %v427 = vlaneseq
    %v428 = vshrl.u32 %v427, 7
    %v429 = vsub.s32 0, %v428
    %v430 = vrot.slane %v425, %v429
    %432 = vmatprep.subr.mxu0 0.0
    %433 = vmatpush1.msra.mxu0 %v409
    %434 = vmatprep.subr.mxu0 0.0
    %435 = vmatpush1.msra.mxu0 %v410
    %436 = vmatprep.subr.mxu0 0.0
    %437 = vmatpush1.msra.mxu0 %v411
    %438 = vmatprep.subr.mxu0 0.0
    %439 = vmatpush1.msra.mxu0 %v412
    %440 = vmatprep.subr.mxu0 0.0
    %441 = vmatpush1.msra.mxu0 %v413
    %442 = vmatprep.subr.mxu0 0.0
    %443 = vmatpush1.msra.mxu0 %v414
    %444 = vmatprep.subr.mxu0 0.0
    %445 = vmatpush1.msra.mxu0 %v415
    %446 = vmatprep.subr.mxu0 0.0
    %447 = vmatpush1.msra.mxu0 %v416
    %448 = vmatprep.subr.mxu0 0.0
    %449 = vmatpush1.msra.mxu0 %v417
    %450 = vmatprep.subr.mxu0 0.0
    %451 = vmatpush1.msra.mxu0 %v418
    %452 = vmatprep.subr.mxu0 0.0
    %453 = vmatpush1.msra.mxu0 %v419
    %454 = vmatprep.subr.mxu0 0.0
    %455 = vmatpush1.msra.mxu0 %v420
    %456 = vmatprep.subr.mxu0 0.0
    %457 = vmatpush1.msra.mxu0 %v421
    %458 = vmatprep.subr.mxu0 0.0
    %459 = vmatpush1.msra.mxu0 %v422
    %460 = vmatprep.subr.mxu0 0.0
    %461 = vmatpush1.msra.mxu0 %v423
    %462 = vmatprep.subr.mxu0 0.0
    %463 = vmatpush1.msra.mxu0 %v424
    %464 = vmatprep.subr.mxu0 0.0
    %465 = vmatpush1.msra.mxu0 0.0
    %466 = vmatprep.subr.mxu0 0.0
    %467 = vmatpush1.msra.mxu0 0.0
    %468 = vmatprep.subr.mxu0 0.0
    %469 = vmatpush1.msra.mxu0 0.0
    %470 = vmatprep.subr.mxu0 0.0
    %471 = vmatpush1.msra.mxu0 0.0
    %472 = vmatprep.subr.mxu0 0.0
    %473 = vmatpush1.msra.mxu0 0.0
    %474 = vmatprep.subr.mxu0 0.0
    %475 = vmatpush1.msra.mxu0 0.0
    %476 = vmatprep.subr.mxu0 0.0
    %477 = vmatpush1.msra.mxu0 0.0
    %478 = vmatprep.subr.mxu0 0.0
    %479 = vmatpush1.msra.mxu0 0.0
    %480 = vmatprep.subr.mxu0 0.0
    %481 = vmatpush1.msra.mxu0 0.0
    %482 = vmatprep.subr.mxu0 0.0
    %483 = vmatpush1.msra.mxu0 0.0
    %484 = vmatprep.subr.mxu0 0.0
    %485 = vmatpush1.msra.mxu0 0.0
    %486 = vmatprep.subr.mxu0 0.0
    %487 = vmatpush1.msra.mxu0 0.0
    %488 = vmatprep.subr.mxu0 0.0
    %489 = vmatpush1.msra.mxu0 0.0
    %490 = vmatprep.subr.mxu0 0.0
    %491 = vmatpush1.msra.mxu0 0.0
    %492 = vmatprep.subr.mxu0 0.0
    %493 = vmatpush1.msra.mxu0 0.0
    %494 = vmatprep.subr.mxu0 0.0
    %495 = vmatpush1.msra.mxu0 0.0
    %496 = vmatprep.mubr.f32.mxu0 0.0
    %497 = vmatmul.mubr.f32.gmra.mrb[0].mxu0 %v408
    %v498 = vpop.f32.mrb[0].mxu0
    %v499 = vadd.f32 %v430, %v498
    %v500 = vpop.f32.mrb[0].mxu0
    %501 = vdwg.mxu0
    %502 = vst [vmem:[#allocation8] sm:$0x3] %v499
    // Predicated region
    $region34: #{tpu_custom_call.1} parent=1 // pred_check
      _
    $region35: #{tpu_custom_call.1} parent=1 // pred_check_branch
      %504 = sbr.rel (0) target = $region37
    $region36: #{tpu_custom_call.1} parent=1 // pred_region
      %s506 = ssub.s32 32, 32
      %507 = vsyncadd [#allocation4], %s506
      %s509 = sshll.u32 [#allocation8], 4
      %s510 = int_to_ptr.vmem [resolvable:$true] %s509
      %512 = dma.vmem_to_hbm [thread:$0]  %s510, 32, %s5, [#allocation4]
    $region37: #{tpu_custom_call.1} parent=1 // pred_fallthru
      _
    // Predicated region
    $region38: #{tpu_custom_call.1} parent=1 // pred_check
      _
    $region39: #{tpu_custom_call.1} parent=1 // pred_check_branch
      %514 = sbr.rel (0) target = $region41
    $region40: #{tpu_custom_call.1} parent=1 // pred_region
      %515 = dma.done [#allocation4], 32
    $region41: #{tpu_custom_call.1} parent=1 // pred_fallthru
      _
    %516 = vsyncpa [#allocation3], 1
    %517 = vsyncpa [#allocation6], 1
    %518 = vsyncpa [#allocation4], 1

</llo_original>
